<compile_context>
chip_gen: v5e
topology: v5e:2x2
jax: 0.10.0
libtpu: 0.0.40
codegen_flags: <defaults>
</compile_context>

<pallas_src>
import math

import jax
import jax.numpy as jnp
from jax.experimental import pallas as pl
from jax.experimental.pallas import tpu as pltpu


_DEFAULT_MIN_PALLAS_BYTES = 1 << 20   # below this, plain fused XLA wins
_MAX_COLS = 2048                      # lane-dense slab width cap (16 * 128)
_TARGET_TILE_BYTES = 8 << 20          # in+out bytes per grid step

# Metadata-only primitives: running fn as plain JAX is free (no data movement).
_VIEW_PRIMS = frozenset({
    "squeeze", "reshape", "transpose", "broadcast_in_dim", "expand_dims",
    "copy",
})

# Primitives that act strictly per-element (safe under arbitrary re-tiling).
_ELEMWISE_PRIMS = frozenset({
    "add", "sub", "mul", "div", "rem", "pow", "integer_pow", "max", "min",
    "neg", "abs", "sign", "floor", "ceil", "round", "exp", "exp2", "expm1",
    "log", "log1p", "sqrt", "rsqrt", "cbrt", "square",
    "tanh", "tan", "sin", "cos", "asin", "acos", "atan", "atan2",
    "sinh", "cosh", "asinh", "acosh", "atanh",
    "logistic", "erf", "erfc", "erf_inv",
    "select_n", "clamp", "is_finite", "not", "and", "or", "xor",
    "eq", "ne", "ge", "gt", "le", "lt",
    "convert_element_type", "add_any", "nextafter", "copy",
    "broadcast_in_dim",   # guarded: inputs must be scalar or the common shape
})

# Call-like primitives we recurse through (jax.nn.* helpers are often jitted
# or custom_jvp-wrapped).
_CALL_PRIMS = frozenset({
    "pjit", "closed_call", "core_call", "custom_jvp_call",
    "custom_vjp_call", "custom_vjp_call_jaxpr", "remat", "checkpoint",
})


def _round_up(x, m):
    return (x + m - 1) // m * m


def _vmem_capacity_bytes():
    try:
        return int(pltpu.get_tpu_info().vmem_capacity_bytes)
    except Exception:
        return 64 << 20   # conservative (v7x-sized) default


def _device_kind():
    try:
        return jax.devices()[0].device_kind.lower()
    except Exception:
        return ""


def _wants_f32_upcast():
    # v5e has no bf16 VPU/EUP path: upcast once per tile instead of per op.
    return "v5" in _device_kind()


def _safe_jaxpr(fn, *args):
    try:
        return jax.make_jaxpr(fn)(*args)
    except Exception:
        return None


def _iter_eqns(jaxpr):
    """All equations, recursing through call-like primitives' sub-jaxprs."""
    for eqn in jaxpr.eqns:
        yield eqn
        if eqn.primitive.name in _CALL_PRIMS:
            for val in eqn.params.values():
                sub = getattr(val, "jaxpr", None)       # ClosedJaxpr -> Jaxpr
                if sub is not None and hasattr(sub, "eqns"):
                    yield from _iter_eqns(sub)
                elif hasattr(val, "eqns"):              # raw Jaxpr
                    yield from _iter_eqns(val)


def _all_prims_in(closed_jaxpr, allowed):
    if closed_jaxpr is None:
        return False
    try:
        for eqn in _iter_eqns(closed_jaxpr.jaxpr):
            name = eqn.primitive.name
            if name in allowed or name in _CALL_PRIMS:
                continue
            return False
        return True
    except Exception:
        return False


def _is_view_only(closed_jaxpr):
    return _all_prims_in(closed_jaxpr, _VIEW_PRIMS)


def _aval_shapes_ok(closed_jaxpr, common_shape):
    """Every intermediate is a scalar or the full common shape (no reductions,
    no closed-over non-scalar arrays, no partial broadcasts)."""
    try:
        jaxpr = closed_jaxpr.jaxpr

        def ok(aval):
            return getattr(aval, "shape", None) in ((), common_shape)

        for v in jaxpr.constvars:
            if getattr(v.aval, "shape", None) != ():
                return False
        for eqn in _iter_eqns(jaxpr):
            for v in list(eqn.invars) + list(eqn.outvars):
                if not ok(v.aval):
                    return False
        for v in jaxpr.outvars:
            if not ok(v.aval):
                return False
        return True
    except Exception:
        return False


def _is_elementwise(closed_jaxpr, args, out_leaves):
    if closed_jaxpr is None or not args:
        return False
    if len({a.shape for a in args}) != 1:
        return False
    common = args[0].shape
    if len(common) == 0:
        return False
    if any(tuple(l.shape) != common for l in out_leaves):
        return False
    if not _all_prims_in(closed_jaxpr, _ELEMWISE_PRIMS):
        return False
    return _aval_shapes_ok(closed_jaxpr, common)


def _choose_cols(n_elems):
    """Largest multiple of 128 (<= _MAX_COLS) that divides n_elems exactly,
    preferring one that leaves >= 8 rows.  None -> no lane-aligned
    factorization: caller falls back to plain XLA (never pads)."""
    if n_elems % 128 != 0:
        return None
    best, best_tall = None, None
    c = 128
    while c <= _MAX_COLS:
        if n_elems % c == 0:
            best = c
            if n_elems // c >= 8:
                best_tall = c
        c += 128
    return best_tall if best_tall is not None else best


def _pick_tile_rows(rows, bytes_per_row, sub):
    cap = _vmem_capacity_bytes()
    budget = max(8 << 20, cap // 2)
    # Largest tm whose double-buffered in+out tiles stay inside the budget.
    vmem_tm = max(sub, (budget // (2 * bytes_per_row)) // sub * sub)
    # Generation target: ~8 MiB of in+out tiles per grid step.
    tgt_tm = max(sub, (_TARGET_TILE_BYTES // bytes_per_row) // sub * sub)
    tm = min(vmem_tm, tgt_tm)
    # Keep the 1-D "parallel" grid at >= 4 steps so v7x's two TensorCores each
    # get >= 2 steps and the pipeliner has something to overlap.
    if rows >= 4 * sub:
        tm = min(tm, _round_up(pl.cdiv(rows, 4), sub))
    if rows <= tm:
        return rows            # single block covers everything (tiny problem)
    return tm


def _make_elementwise_executor(fn, args, out_leaves, out_tree):
    """Lane-dense, 1-D-tiled, double-buffered elementwise Pallas kernel,
    wrapped (reshape -> pallas_call -> reshape) in a single jax.jit."""
    n_in, n_out = len(args), len(out_leaves)
    n_elems = int(args[0].size)

    cols = _choose_cols(n_elems)
    if cols is None:
        return None            # no clean factorization -> plain XLA
    rows = n_elems // cols

    itemsizes = ([a.dtype.itemsize for a in args]
                 + [jnp.dtype(l.dtype).itemsize for l in out_leaves])
    min_item = min(itemsizes)
    sub = 8 if min_item >= 4 else (16 if min_item >= 2 else 32)

    bytes_per_row = cols * sum(itemsizes)
    tm = _pick_tile_rows(rows, bytes_per_row, sub)
    grid = (pl.cdiv(rows, tm),)          # ragged last block handled by Pallas
    tile_bytes = bytes_per_row * tm
    cap = _vmem_capacity_bytes()
    vmem_limit = int(min(cap * 3 // 4, max(32 << 20, 4 * tile_bytes)))

    upcast = _wants_f32_upcast() and any(a.dtype == jnp.bfloat16 for a in args)

    def kernel(*refs):
        in_refs, out_refs = refs[:n_in], refs[n_in:]
        vals = [r[...] for r in in_refs]
        if upcast:
            # v5e: one up/downcast per tile instead of per-op bf16 pack/unpack.
            vals = [v.astype(jnp.float32) if v.dtype == jnp.bfloat16 else v
                    for v in vals]
        outs = jax.tree_util.tree_leaves(fn(*vals))   # LambdaLayer hot path
        # Trace-time structural check against the eval_shape-derived outputs.
        assert len(outs) == n_out, "LambdaLayer: fn output structure changed"
        for o_ref, o in zip(out_refs, outs):
            o_ref[...] = o.astype(o_ref.dtype)

    spec = pl.BlockSpec((tm, cols), lambda i: (i, 0))
    call = pl.pallas_call(
        kernel,
        grid=grid,
        in_specs=[spec] * n_in,
        out_specs=tuple(spec for _ in range(n_out)),
        out_shape=tuple(jax.ShapeDtypeStruct((rows, cols), l.dtype)
                        for l in out_leaves),
        compiler_params=pltpu.CompilerParams(
            dimension_semantics=("parallel",),   # v7x: both TCs share the grid
            vmem_limit_bytes=vmem_limit,
        ),
    )

    out_shapes = [tuple(l.shape) for l in out_leaves]

    @jax.jit
    def run(*xs):
        slabs = [x.reshape(rows, cols) for x in xs]   # metadata-only under jit
        results = call(*slabs)
        if not isinstance(results, (list, tuple)):
            results = (results,)
        outs = [r.reshape(s) for r, s in zip(results, out_shapes)]
        return jax.tree_util.tree_unflatten(out_tree, outs)

    return run


def _build_executor(fn, args, min_pallas_bytes):
    """Analyze fn once per (shape, dtype) signature; return a callable."""
    def plain(*xs):
        return fn(*xs)

    try:
        out_aval = jax.eval_shape(fn, *args)
    except Exception:
        return plain
    out_leaves, out_tree = jax.tree_util.tree_flatten(out_aval)
    if (not args or not out_leaves
            or any(not hasattr(l, "shape") for l in out_leaves)
            or any(a.ndim == 0 for a in args)
            or any(len(l.shape) == 0 for l in out_leaves)):
        return plain

    closed_jaxpr = _safe_jaxpr(fn, *args)

    # (1) View-only lambda (e.g. the verl value-head squeeze): metadata op.
    if _is_view_only(closed_jaxpr):
        return plain

    # (2) Size gate: tiny tensors are cheaper as plain fused XLA.
    total_bytes = (sum(a.size * a.dtype.itemsize for a in args)
                   + sum(math.prod(l.shape) * jnp.dtype(l.dtype).itemsize
                         for l in out_leaves))
    if total_bytes < min_pallas_bytes:
        return plain

    # Bool in/out: let XLA handle predicate packing.
    if (any(a.dtype == jnp.bool_ for a in args)
            or any(jnp.dtype(l.dtype) == jnp.bool_ for l in out_leaves)):
        return plain

    # (3) Verified elementwise with a clean lane-dense factorization.
    if _is_elementwise(closed_jaxpr, args, out_leaves):
        exe = _make_elementwise_executor(fn, args, out_leaves, out_tree)
        if exe is not None:
            return exe

    # (4) Anything else: plain XLA.  (The old grid=() full-block Pallas
    #     fallback was removed: it only added an HBM round trip and broke
    #     fusion with surrounding producers/consumers.)
    return plain


class LambdaLayer:
    """JAX/Pallas port of verl.utils.model.LambdaLayer (no parameters).

    forward(*args) == fn(*args); `min_pallas_bytes` only controls whether the
    stored fn executes inside a Pallas kernel or as plain XLA.  Executors are
    cached per (shape, dtype) signature so the Pallas path pays jit/analysis
    cost only once.
    """

    def __init__(self, fn, min_pallas_bytes=_DEFAULT_MIN_PALLAS_BYTES):
        self.fn = fn
        self.min_pallas_bytes = min_pallas_bytes
        self._cache = {}

    def __call__(self, *args, **kwargs):
        if kwargs:
            # TODO(synk): Pallas kernel refs are positional; kwargs run as XLA.
            return self.fn(*args, **kwargs)
        try:
            args = tuple(jnp.asarray(a) for a in args)
        except Exception:
            return self.fn(*args)
        key = tuple((tuple(a.shape), str(a.dtype)) for a in args)
        executor = self._cache.get(key)
        if executor is None:
            executor = _build_executor(self.fn, args, self.min_pallas_bytes)
            self._cache[key] = executor
        return executor(*args)


if __name__ == "__main__":
    key = jax.random.PRNGKey(0)
    k1, k2, k3 = jax.random.split(key, 3)

    # --- Use case 1: verl value-head squeeze, fn = squeeze(x, dim=-1) ---
    # View-only lambda -> bypasses Pallas entirely (metadata op in XLA).
    value_head = LambdaLayer(fn=lambda x: jnp.squeeze(x, axis=-1))
    v = jax.random.normal(k1, (2, 8, 1), dtype=jnp.float32)     # (batch, seq, 1)
    out_v = jax.block_until_ready(value_head(v))
    assert out_v.shape == (2, 8), out_v.shape
    assert jnp.allclose(out_v, jnp.squeeze(v, axis=-1)), "squeeze lambda mismatch"

    # --- Use case 2: elementwise lambda through the tiled Pallas kernel ---
    # The demo tensor is only 8 KiB, which the default size gate would route
    # to plain XLA; force the Pallas path (min_pallas_bytes=0) so the kernel
    # is exercised here.
    x = jax.random.normal(k2, (2, 4, 16, 16), dtype=jnp.float32)  # NCHW-style
    ref_x = jnp.tanh(x) * 2.0 + 1.0
    act_pallas = LambdaLayer(fn=lambda t: jnp.tanh(t) * 2.0 + 1.0,
                             min_pallas_bytes=0)
    out_x = jax.block_until_ready(act_pallas(x))
    assert out_x.shape == x.shape and out_x.dtype == x.dtype
    assert jnp.allclose(out_x, ref_x, atol=1e-6), "elementwise lambda mismatch"
    # Second call hits the cached jitted executor (no retrace / re-analysis).
    out_x2 = jax.block_until_ready(act_pallas(x))
    assert jnp.allclose(out_x2, ref_x, atol=1e-6), "cached executor mismatch"

    # Same lambda with default settings: size gate routes to plain fused XLA.
    act_default = LambdaLayer(fn=lambda t: jnp.tanh(t) * 2.0 + 1.0)
    out_d = jax.block_until_ready(act_default(x))
    assert jnp.allclose(out_d, ref_x, atol=1e-6), "size-gated path mismatch"

    # --- Use case 3: bf16 elementwise (narrow-dtype sublane rounding path) ---
    xb = jax.random.normal(k3, (2, 8, 64), dtype=jnp.bfloat16)
    silu = LambdaLayer(fn=lambda t: jnp.tanh(t) * t, min_pallas_bytes=0)
    out_b = jax.block_until_ready(silu(xb))
    ref_b = jnp.tanh(xb) * xb
    assert out_b.shape == xb.shape and out_b.dtype == xb.dtype
    assert jnp.allclose(out_b.astype(jnp.float32), ref_b.astype(jnp.float32),
                        atol=3e-2, rtol=3e-2), "bf16 elementwise mismatch"

    print("KERNEL_OK")
</pallas_src>

<mosaic_0001>
module attributes {stable_mosaic.version = 11 : i64} {
  func.func @kernel(%arg0: i32, %arg1: memref<8x256xf32, #tpu.memory_space<vmem>>, %arg2: memref<8x256xf32, #tpu.memory_space<vmem>>) attributes {dimension_semantics = [#tpu.dimension_semantics<parallel>], iteration_bounds = array<i64: 1>, scalar_prefetch = 0 : i64, scratch_operands = 0 : i64, tpu.core_type = #tpu.core_type<tc>, window_params = [{transform_indices = @transform_0, window_bounds = array<i64: 8, 256>}, {transform_indices = @transform_1, window_bounds = array<i64: 8, 256>}]} {
    %c0 = arith.constant 0 : index
    %c0_0 = arith.constant 0 : index
    %0 = vector.load %arg1[%c0, %c0_0] : memref<8x256xf32, #tpu.memory_space<vmem>>, vector<8x256xf32>
    %1 = math.tanh %0 : vector<8x256xf32>
    %cst = arith.constant 2.000000e+00 : f32
    %2 = vector.broadcast %cst : f32 to vector<8x256xf32>
    %3 = arith.mulf %1, %2 : vector<8x256xf32>
    %cst_1 = arith.constant 1.000000e+00 : f32
    %4 = vector.broadcast %cst_1 : f32 to vector<8x256xf32>
    %5 = arith.addf %3, %4 : vector<8x256xf32>
    %c0_2 = arith.constant 0 : index
    %c0_3 = arith.constant 0 : index
    %6 = vector.load %arg2[%c0_2, %c0_3] : memref<8x256xf32, #tpu.memory_space<vmem>>, vector<8x256xf32>
    tpu.vector_store %arg2[%c0_2, %c0_3], %5 {strides = array<i32>} : memref<8x256xf32, #tpu.memory_space<vmem>>, vector<8x256xf32>,
    return
  }
  func.func @transform_0(%arg0: i32) -> (i32, i32) {
    %c0_i32 = arith.constant 0 : i32
    %c0_i32_0 = arith.constant 0 : i32
    return %arg0, %c0_i32 : i32, i32
  }
  func.func @transform_1(%arg0: i32) -> (i32, i32) {
    %c0_i32 = arith.constant 0 : i32
    %c0_i32_0 = arith.constant 0 : i32
    return %arg0, %c0_i32 : i32, i32
  }
}

</mosaic_0001>

<llo_original>
// kernel: run.1
$region0: #{run.1}
  #allocation0 [shape = 'u32[]', space=smem, size = 0x4, offset = 0x4, fixed_abs, tag = 'smem constant byte address 0x4 - core index']
  #allocation1 [shape = 'u32[72,128]{1,0:T(1,128)}', space=vmem, size = 0x9000, scoped, tag = 'internal scratch']
  %s0 = inlined_call_operand.vmem [shape: f32[8,256], index: 0, kind: input, shape index: {}]
  %s1 = inlined_call_operand.vmem [shape: f32[8,256], index: 1, kind: output, shape index: {}]
  %s2 = sld [smem:[#allocation0]]
  $region14: #{run.1} parent=0
    _
  %s4 = ssub.s32 1, %s2
  %s5 = scalar_select 0, %s4, %s2
  // Predicated region
  $region2: #{run.1} parent=0 // pred_check
    _
  $region3: #{run.1} parent=0 // pred_check_branch
    %7 = sbr.rel (0) target = $region5
  $region4: #{run.1} parent=0 // pred_region
    _
  $region5: #{run.1} parent=0 // pred_fallthru
    _
  %v8 = vld [vmem:[%s0] sm:$0xff]
  %v9 = vld [vmem:[%s0 + $0x8] sm:$0xff]
  %v10 = vtanh.pop %v8
  %v11 = vtanh.pop %v9
  %v12 = vmul.f32 %v10, 2.0
  %v13 = vmul.f32 %v11, 2.0
  %v14 = vadd.f32 %v12, 1.0
  %v15 = vadd.f32 %v13, 1.0
  %16 = vst [vmem:[%s1] sm:$0xff] %v14
  %17 = vst [vmem:[%s1 + $0x8] sm:$0xff] %v15
  // Predicated region
  $region6: #{run.1} parent=0 // pred_check
    _
  $region7: #{run.1} parent=0 // pred_check_branch
    %19 = sbr.rel (0) target = $region9
  $region8: #{run.1} parent=0 // pred_region
    _
  $region9: #{run.1} parent=0 // pred_fallthru
    _
  // Predicated region
  $region10: #{run.1} parent=0 // pred_check
    _
  $region11: #{run.1} parent=0 // pred_check_branch
    %21 = sbr.rel (0) target = $region13
  $region12: #{run.1} parent=0 // pred_region
    _
  $region13: #{run.1} parent=0 // pred_fallthru
    _

</llo_original>
